<compile_context>
chip_gen: v6e
topology: v6e:2x2x1
jax: 0.10.0
libtpu: 0.0.40
codegen_flags: <defaults>
</compile_context>

<pallas_src>
import math

import jax
import jax.numpy as jnp
from jax.experimental import pallas as pl
from jax.experimental.pallas import tpu as pltpu


def _pe_add_kernel(x_ref, pe_ref, o_ref):
    # Broadcast-add the (1, lanes) positional row onto the (tile_m, lanes) x tile.
    o_ref[...] = x_ref[...] + pe_ref[...]


def _pe_add_call(x2d, pe_vec, tile_m):
    rows, lanes = x2d.shape
    grid = (rows // tile_m,)
    return pl.pallas_call(
        _pe_add_kernel,
        out_shape=jax.ShapeDtypeStruct((rows, lanes), x2d.dtype),
        grid_spec=pltpu.PrefetchScalarGridSpec(
            num_scalar_prefetch=0,
            grid=grid,
            in_specs=[
                pl.BlockSpec((tile_m, lanes), lambda i: (i, 0)),  # x row tile
                pl.BlockSpec((1, lanes), lambda i: (0, 0)),       # PE row (resident)
            ],
            out_specs=pl.BlockSpec((tile_m, lanes), lambda i: (i, 0)),
        ),
        compiler_params=pltpu.CompilerParams(
            dimension_semantics=("parallel",),
        ),
    )(x2d, pe_vec)


def build_pe_buffer(d_model, max_len=5000):
    """Mirror of the PyTorch buffer construction (leading batch dim squeezed)."""
    position = jnp.arange(max_len, dtype=jnp.float32)[:, None]
    div_term = jnp.exp(
        jnp.arange(0, d_model, 2, dtype=jnp.float32) * (-math.log(10000.0) / d_model)
    )
    angles = position * div_term  # (max_len, ceil(d_model/2))
    if d_model > 2:
        pe = jnp.zeros((max_len, d_model), jnp.float32)
        pe = pe.at[:, 0::2].set(jnp.sin(angles))
        pe = pe.at[:, 1::2].set(jnp.cos(angles))
    else:
        pe = jnp.sin(angles)
    return pe


def positional_encoding_fixed(x, pe_buf, *, max_tile_rows=1024):
    """Forward of PositionalEncoding_Fixed.

    x:      [batch, seq, d_model] float32
    pe_buf: [max_len, pe_cols]    (registered buffer, batch dim squeezed)
    """
    batch, seq, d_model = x.shape
    dtype = x.dtype

    # NOTE: the original module indexes the *single* row at position `seq`
    # (pe[:, x.size(1), :]), not the first `seq` rows — preserved here.
    pe_row = jnp.broadcast_to(pe_buf[seq], (d_model,)).astype(dtype)

    # Choose a lane-dense 2-D layout for the streaming add.
    if d_model % 128 == 0:
        lanes = d_model
        x2d = x.reshape(batch * seq, d_model)
        pe_vec = pe_row[None, :]
    elif 128 % d_model == 0 and (batch * seq * d_model) % 128 == 0:
        # Pack 128 // d_model feature rows per 128-lane vreg row; the PE pattern
        # repeats every d_model lanes, so tiling the row keeps the add exact.
        reps = 128 // d_model
        lanes = 128
        x2d = x.reshape((batch * seq * d_model) // 128, 128)
        pe_vec = jnp.tile(pe_row, reps)[None, :]
    else:
        # Fallback: last block dim equals the full array dim, so still legal.
        lanes = d_model
        x2d = x.reshape(batch * seq, d_model)
        pe_vec = pe_row[None, :]

    rows = x2d.shape[0]
    if rows <= max_tile_rows:
        tile_m, padded_rows = rows, rows          # single (or few) big blocks
    else:
        tile_m = max((max_tile_rows // 8) * 8, 8)  # multiple of 8 (sublane rule)
        padded_rows = ((rows + tile_m - 1) // tile_m) * tile_m

    if padded_rows != rows:
        x2d = jnp.pad(x2d, ((0, padded_rows - rows), (0, 0)))

    out2d = _pe_add_call(x2d, pe_vec, tile_m)

    if padded_rows != rows:
        out2d = out2d[:rows]

    # TODO(synk): training-mode dropout (pltpu.prng_random_bits mask + scale) not
    # implemented; eval-mode dropout is identity.
    return out2d.reshape(batch, seq, d_model)


def reference(x, pe_buf):
    seq = x.shape[1]
    d_model = x.shape[2]
    pe_row = jnp.broadcast_to(pe_buf[seq], (d_model,))
    return x + pe_row[None, None, :]


if __name__ == "__main__":
    key = jax.random.PRNGKey(0)

    batch, seq, d_model, max_len = 2, 8, 32, 5000
    x = jax.random.normal(key, (batch, seq, d_model), jnp.float32)
    pe_buf = build_pe_buffer(d_model, max_len)

    out = positional_encoding_fixed(x, pe_buf)
    jax.block_until_ready(out)

    ref = reference(x, pe_buf)
    assert out.shape == x.shape
    assert jnp.allclose(out, ref, atol=1e-6, rtol=1e-6), "mismatch vs JAX reference"

    print("KERNEL_OK")
</pallas_src>

<mosaic_0001>
module attributes {stable_mosaic.version = 11 : i64} {
  func.func @_pe_add_kernel(%arg0: i32, %arg1: memref<4x128xf32, #tpu.memory_space<vmem>>, %arg2: memref<1x128xf32, #tpu.memory_space<vmem>>, %arg3: memref<4x128xf32, #tpu.memory_space<vmem>>) attributes {dimension_semantics = [#tpu.dimension_semantics<parallel>], iteration_bounds = array<i64: 1>, scalar_prefetch = 0 : i64, scratch_operands = 0 : i64, tpu.core_type = #tpu.core_type<tc>, window_params = [{transform_indices = @transform_0, window_bounds = array<i64: 4, 128>}, {pipeline_mode = #tpu.pipeline_mode<synchronous>, transform_indices = @transform_1, window_bounds = array<i64: 1, 128>}, {transform_indices = @transform_2, window_bounds = array<i64: 4, 128>}]} {
    %c0 = arith.constant 0 : index
    %c0_0 = arith.constant 0 : index
    %0 = vector.load %arg1[%c0, %c0_0] : memref<4x128xf32, #tpu.memory_space<vmem>>, vector<4x128xf32>
    %c0_1 = arith.constant 0 : index
    %c0_2 = arith.constant 0 : index
    %1 = vector.load %arg2[%c0_1, %c0_2] : memref<1x128xf32, #tpu.memory_space<vmem>>, vector<1x128xf32>
    %2 = vector.broadcast %1 : vector<1x128xf32> to vector<4x128xf32>
    %3 = arith.addf %0, %2 : vector<4x128xf32>
    %c0_3 = arith.constant 0 : index
    %c0_4 = arith.constant 0 : index
    %4 = vector.load %arg3[%c0_3, %c0_4] : memref<4x128xf32, #tpu.memory_space<vmem>>, vector<4x128xf32>
    tpu.vector_store %arg3[%c0_3, %c0_4], %3 {strides = array<i32>} : memref<4x128xf32, #tpu.memory_space<vmem>>, vector<4x128xf32>,
    return
  }
  func.func @transform_0(%arg0: i32) -> (i32, i32) {
    %c0_i32 = arith.constant 0 : i32
    %c0_i32_0 = arith.constant 0 : i32
    return %arg0, %c0_i32 : i32, i32
  }
  func.func @transform_1(%arg0: i32) -> (i32, i32) {
    %c0_i32 = arith.constant 0 : i32
    %c0_i32_0 = arith.constant 0 : i32
    %c0_i32_1 = arith.constant 0 : i32
    return %c0_i32, %c0_i32_0 : i32, i32
  }
  func.func @transform_2(%arg0: i32) -> (i32, i32) {
    %c0_i32 = arith.constant 0 : i32
    %c0_i32_0 = arith.constant 0 : i32
    return %arg0, %c0_i32 : i32, i32
  }
}

</mosaic_0001>

<llo_original>
// kernel: tpu_custom_call.1
$region0: #{tpu_custom_call.1}
  #allocation0 [shape = 'u32[]', space=smem, size = 0x4, offset = 0x4, fixed_abs, tag = 'smem constant byte address 0x4 - core index']
  #allocation1 [shape = 'u32[144,128]{1,0:T(1,128)}', space=vmem, size = 0x12000, scoped, tag = 'internal scratch']
  %s0 = inlined_call_operand.hbm [shape: f32[4,128], index: 0, kind: input, shape index: {}]
  %s1 = inlined_call_operand.vmem [shape: f32[1,128], index: 1, kind: input, shape index: {}]
  %s2 = inlined_call_operand.hbm [shape: f32[4,128], index: 2, kind: output, shape index: {}]
  %s3 = sld [smem:[#allocation0]]
  $region22: #{tpu_custom_call.1} parent=0
    _
  %s5 = ssub.s32 1, %s3
  %s6 = scalar_select 0, %s5, %s3
  $region1: #{tpu_custom_call.1} parent=0
    #allocation2 [shape = 'u8[2048]{0}', space=vmem, size = 0x800, scoped, tag = 'input window, operand 0, single buffered']
    #allocation3 [shape = 's32[1]{0}', space=sflag, size = 0x4, scoped, tag = 'scoped memory for tpu_custom_call.1']
    #allocation4 [shape = 's32[1]{0}', space=sflag, size = 0x4, scoped, tag = 'scoped memory for tpu_custom_call.1']
    #allocation5 [shape = 'u8[2048]{0}', space=vmem, size = 0x800, scoped, tag = 'output window, operand 0, single buffered']
    %7 = vsyncpa [#allocation3], 0
    %8 = vsyncpa [#allocation4], 0
    // Predicated region
    $region2: #{tpu_custom_call.1} parent=1 // pred_check
      _
    $region3: #{tpu_custom_call.1} parent=1 // pred_check_branch
      %10 = sbr.rel (0) target = $region5
    $region4: #{tpu_custom_call.1} parent=1 // pred_region
      %s12 = ssub.s32 64, 64
      %13 = vsyncadd [#allocation3], %s12
      %s15 = sshll.u32 [#allocation2], 4
      %s16 = int_to_ptr.vmem [resolvable:$true] %s15
      %18 = dma.hbm_to_vmem [thread:$0]  %s0, 64, %s16, [#allocation3]
    $region5: #{tpu_custom_call.1} parent=1 // pred_fallthru
      _
    // Predicated region
    $region6: #{tpu_custom_call.1} parent=1 // pred_check
      _
    $region7: #{tpu_custom_call.1} parent=1 // pred_check_branch
      %20 = sbr.rel (0) target = $region9
    $region8: #{tpu_custom_call.1} parent=1 // pred_region
      _
    $region9: #{tpu_custom_call.1} parent=1 // pred_fallthru
      _
    // Predicated region
    $region10: #{tpu_custom_call.1} parent=1 // pred_check
      _
    $region11: #{tpu_custom_call.1} parent=1 // pred_check_branch
      %22 = sbr.rel (0) target = $region13
    $region12: #{tpu_custom_call.1} parent=1 // pred_region
      %23 = dma.done [#allocation3], 64
    $region13: #{tpu_custom_call.1} parent=1 // pred_fallthru
      _
    %v24 = vld [vmem:[#allocation2] sm:$0xf]
    %v25 = vld [vmem:[%s1] sm:$0x1]
    %v27 = vlaneseq
    %v28 = vshrl.u32 %v27, 7
    %v29 = vsub.s32 0, %v28
    %v30 = vrot.slane %v25, %v29
    %v32 = vadd.f32 %v24, %v30
    %33 = vst [vmem:[#allocation5] sm:$0xf] %v32
    // Predicated region
    $region14: #{tpu_custom_call.1} parent=1 // pred_check
      _
    $region15: #{tpu_custom_call.1} parent=1 // pred_check_branch
      %35 = sbr.rel (0) target = $region17
    $region16: #{tpu_custom_call.1} parent=1 // pred_region
      %s37 = ssub.s32 64, 64
      %38 = vsyncadd [#allocation4], %s37
      %s40 = sshll.u32 [#allocation5], 4
      %s41 = int_to_ptr.vmem [resolvable:$true] %s40
      %43 = dma.vmem_to_hbm [thread:$0]  %s41, 64, %s2, [#allocation4]
    $region17: #{tpu_custom_call.1} parent=1 // pred_fallthru
      _
    // Predicated region
    $region18: #{tpu_custom_call.1} parent=1 // pred_check
      _
    $region19: #{tpu_custom_call.1} parent=1 // pred_check_branch
      %45 = sbr.rel (0) target = $region21
    $region20: #{tpu_custom_call.1} parent=1 // pred_region
      %46 = dma.done [#allocation4], 64
    $region21: #{tpu_custom_call.1} parent=1 // pred_fallthru
      _
    %47 = vsyncpa [#allocation3], 1
    %48 = vsyncpa [#allocation4], 1

</llo_original>
